<compile_context>
chip_gen: v6e
topology: v6e:2x2x1
jax: 0.10.0
libtpu: 0.0.40
codegen_flags: <defaults>
</compile_context>

<pallas_src>
import jax
import jax.numpy as jnp
from jax.experimental import pallas as pl
from jax.experimental.pallas import tpu as pltpu

LN_EPS = 1e-5
_SUBLANE = 8
# Batch-tile cap.  Footprint at TB=8192 (S=16, H=64, A=8, f32):
#   x: 512 KiB * 2 bufs, out: 256 KiB * 2 bufs, h intermediate: 2 MiB  => ~4-5 MiB total,
# well inside v5e's 16 MiB scoped-VMEM default and v7x's 64 MiB physical VMEM.
_TB_MAX = 8192


def _round_up(n, m):
    return ((n + m - 1) // m) * m


def qnetwork_kernel(x_ref, w1_ref, vecs_ref, w2_ref, b2_ref, o_ref):
    b1 = vecs_ref[0:1, :]          # (1, H)
    gamma = vecs_ref[1:2, :]       # (1, H)
    beta = vecs_ref[2:3, :]        # (1, H)

    # --- Linear 1: (TB, S) @ (S, H) + b1 -> (TB, H) ---
    h = jnp.dot(x_ref[...], w1_ref[...], preferred_element_type=jnp.float32) + b1

    # --- LayerNorm over the hidden axis, single pass over h ---
    mean = jnp.mean(h, axis=-1, keepdims=True)
    mean_sq = jnp.mean(h * h, axis=-1, keepdims=True)
    var = mean_sq - mean * mean
    h = (h - mean) * jax.lax.rsqrt(var + LN_EPS) * gamma + beta

    # --- ReLU ---
    h = jnp.maximum(h, 0.0)

    # --- Linear 2: (TB, H) @ (H, A) + b2 -> (TB, A), unpadded store ---
    out = jnp.dot(h, w2_ref[...], preferred_element_type=jnp.float32) + b2_ref[...]
    o_ref[...] = out.astype(o_ref.dtype)


@jax.jit
def qnetwork_forward(x, params):
    w1, b1, gamma, beta, w2, b2 = params
    B, S = x.shape
    H = w1.shape[1]
    A = w2.shape[1]

    # Pack the three (1, H) per-feature vectors into one input -> single DMA.
    vecs = jnp.concatenate([b1, gamma, beta], axis=0)          # (3, H)

    # Batch tiling: TB is a multiple of 8 (sublane requirement), capped at _TB_MAX.
    B8 = _round_up(B, _SUBLANE)
    TB = min(_TB_MAX, B8)
    # v7x has 2 TensorCores: give the "parallel" grid axis at least 2 steps when the
    # batch is big enough to split (each step remains a multiple of 8 sublanes).
    if B8 > _SUBLANE:
        TB = min(TB, _round_up(pl.cdiv(B8, 2), _SUBLANE))
    B_pad = _round_up(B, TB)
    x_p = jnp.pad(x, ((0, B_pad - B), (0, 0)))                 # (B_pad, S)
    grid = (B_pad // TB,)

    cost = pl.CostEstimate(
        flops=2 * B_pad * (S * H + H * A) + 8 * B_pad * H,
        transcendentals=B_pad,  # one rsqrt per row
        bytes_accessed=(x_p.size + w1.size + vecs.size + w2.size + b2.size
                        + B_pad * A) * 4,
    )

    out = pl.pallas_call(
        qnetwork_kernel,
        out_shape=jax.ShapeDtypeStruct((B_pad, A), jnp.float32),
        grid=grid,
        in_specs=[
            pl.BlockSpec((TB, S), lambda i: (i, 0)),          # x: batch-blocked
            pl.BlockSpec((S, H), lambda i: (0, 0)),           # w1: resident
            pl.BlockSpec((3, H), lambda i: (0, 0)),           # b1/gamma/beta: resident
            pl.BlockSpec((H, A), lambda i: (0, 0)),           # w2: resident
            pl.BlockSpec((1, A), lambda i: (0, 0)),           # b2: resident
        ],
        out_specs=pl.BlockSpec((TB, A), lambda i: (i, 0)),    # unpadded, contiguous in HBM
        compiler_params=pltpu.CompilerParams(
            dimension_semantics=("parallel",),
        ),
        cost_estimate=cost,
    )(x_p, w1, vecs, w2, b2)

    return out[:B, :]


def init_params(key, state_dim, action_dim, hidden_size=64):
    """Deterministic init mimicking PyTorch defaults (uniform for Linear, ones/zeros for LN)."""
    k1, k2, k3, k4 = jax.random.split(key, 4)
    bound1 = 1.0 / (state_dim ** 0.5)
    w1 = jax.random.uniform(k1, (state_dim, hidden_size), jnp.float32, -bound1, bound1)
    b1 = jax.random.uniform(k2, (1, hidden_size), jnp.float32, -bound1, bound1)
    gamma = jnp.ones((1, hidden_size), jnp.float32)
    beta = jnp.zeros((1, hidden_size), jnp.float32)
    bound2 = 1.0 / (hidden_size ** 0.5)
    w2 = jax.random.uniform(k3, (hidden_size, action_dim), jnp.float32, -bound2, bound2)
    b2 = jax.random.uniform(k4, (1, action_dim), jnp.float32, -bound2, bound2)
    return (w1, b1, gamma, beta, w2, b2)


def qnetwork_ref(x, params):
    """Pure-JAX reference for correctness check."""
    w1, b1, gamma, beta, w2, b2 = params
    h = x @ w1 + b1
    mean = jnp.mean(h, axis=-1, keepdims=True)
    var = jnp.mean((h - mean) ** 2, axis=-1, keepdims=True)
    h = (h - mean) * jax.lax.rsqrt(var + LN_EPS) * gamma + beta
    h = jnp.maximum(h, 0.0)
    return h @ w2 + b2


if __name__ == "__main__":
    key = jax.random.PRNGKey(0)
    kx, kp = jax.random.split(key)

    batch, state_dim, action_dim, hidden = 8, 16, 8, 64
    x = jax.random.normal(kx, (batch, state_dim), jnp.float32)
    params = init_params(kp, state_dim, action_dim, hidden)

    out = qnetwork_forward(x, params)
    out = jax.block_until_ready(out)

    ref = qnetwork_ref(x, params)
    assert out.shape == (batch, action_dim)
    assert jnp.allclose(out, ref, atol=1e-4, rtol=1e-4), "mismatch vs reference"

    print("KERNEL_OK")
</pallas_src>

<mosaic_0001>
module attributes {stable_mosaic.version = 11 : i64} {
  func.func @qnetwork_kernel(%arg0: i32, %arg1: memref<8x16xf32, #tpu.memory_space<vmem>>, %arg2: memref<16x64xf32, #tpu.memory_space<vmem>>, %arg3: memref<3x64xf32, #tpu.memory_space<vmem>>, %arg4: memref<64x8xf32, #tpu.memory_space<vmem>>, %arg5: memref<1x8xf32, #tpu.memory_space<vmem>>, %arg6: memref<8x8xf32, #tpu.memory_space<vmem>>) attributes {dimension_semantics = [#tpu.dimension_semantics<parallel>], iteration_bounds = array<i64: 1>, scalar_prefetch = 0 : i64, scratch_operands = 0 : i64, tpu.core_type = #tpu.core_type<tc>, window_params = [{transform_indices = @transform_0, window_bounds = array<i64: 8, 16>}, {pipeline_mode = #tpu.pipeline_mode<synchronous>, transform_indices = @transform_1, window_bounds = array<i64: 16, 64>}, {pipeline_mode = #tpu.pipeline_mode<synchronous>, transform_indices = @transform_2, window_bounds = array<i64: 3, 64>}, {pipeline_mode = #tpu.pipeline_mode<synchronous>, transform_indices = @transform_3, window_bounds = array<i64: 64, 8>}, {pipeline_mode = #tpu.pipeline_mode<synchronous>, transform_indices = @transform_4, window_bounds = array<i64: 1, 8>}, {transform_indices = @transform_5, window_bounds = array<i64: 8, 8>}]} {
    %c0 = arith.constant 0 : index
    %c0_0 = arith.constant 0 : index
    %0 = vector.load %arg3[%c0, %c0_0] : memref<3x64xf32, #tpu.memory_space<vmem>>, vector<1x64xf32>
    %c1 = arith.constant 1 : index
    %c0_1 = arith.constant 0 : index
    %1 = vector.load %arg3[%c1, %c0_1] : memref<3x64xf32, #tpu.memory_space<vmem>>, vector<1x64xf32>
    %c2 = arith.constant 2 : index
    %c0_2 = arith.constant 0 : index
    %2 = vector.load %arg3[%c2, %c0_2] : memref<3x64xf32, #tpu.memory_space<vmem>>, vector<1x64xf32>
    %c0_3 = arith.constant 0 : index
    %c0_4 = arith.constant 0 : index
    %3 = vector.load %arg1[%c0_3, %c0_4] : memref<8x16xf32, #tpu.memory_space<vmem>>, vector<8x16xf32>
    %c0_5 = arith.constant 0 : index
    %c0_6 = arith.constant 0 : index
    %4 = vector.load %arg2[%c0_5, %c0_6] : memref<16x64xf32, #tpu.memory_space<vmem>>, vector<16x64xf32>
    %cst = arith.constant dense<0.000000e+00> : vector<8x64xf32>
    %5 = tpu.matmul %3, %4, %cst {dimension_numbers = #tpu.dot_dimension_numbers<[1], [0], [0], [1], [0, 0, 1, 1], [], []>} : vector<8x16xf32>, vector<16x64xf32>, vector<8x64xf32> -> vector<8x64xf32>
    %6 = vector.broadcast %0 : vector<1x64xf32> to vector<8x64xf32>
    %7 = arith.addf %5, %6 : vector<8x64xf32>
    %cst_7 = arith.constant dense<0.000000e+00> : vector<8xf32>
    %8 = vector.multi_reduction <add>, %7, %cst_7 [1] : vector<8x64xf32> to vector<8xf32>
    %9 = vector.shape_cast %8 : vector<8xf32> to vector<8x1xf32>
    %cst_8 = arith.constant 6.400000e+01 : f32
    %10 = vector.broadcast %cst_8 : f32 to vector<8x1xf32>
    %11 = arith.divf %9, %10 : vector<8x1xf32>
    %12 = arith.mulf %7, %7 : vector<8x64xf32>
    %cst_9 = arith.constant dense<0.000000e+00> : vector<8xf32>
    %13 = vector.multi_reduction <add>, %12, %cst_9 [1] : vector<8x64xf32> to vector<8xf32>
    %14 = vector.shape_cast %13 : vector<8xf32> to vector<8x1xf32>
    %cst_10 = arith.constant 6.400000e+01 : f32
    %15 = vector.broadcast %cst_10 : f32 to vector<8x1xf32>
    %16 = arith.divf %14, %15 : vector<8x1xf32>
    %17 = arith.mulf %11, %11 : vector<8x1xf32>
    %18 = arith.subf %16, %17 : vector<8x1xf32>
    %19 = vector.broadcast %11 : vector<8x1xf32> to vector<8x64xf32>
    %20 = arith.subf %7, %19 : vector<8x64xf32>
    %cst_11 = arith.constant 9.99999974E-6 : f32
    %21 = vector.broadcast %cst_11 : f32 to vector<8x1xf32>
    %22 = arith.addf %18, %21 : vector<8x1xf32>
    %23 = math.rsqrt %22 : vector<8x1xf32>
    %24 = vector.broadcast %23 : vector<8x1xf32> to vector<8x64xf32>
    %25 = arith.mulf %20, %24 : vector<8x64xf32>
    %26 = vector.broadcast %1 : vector<1x64xf32> to vector<8x64xf32>
    %27 = arith.mulf %25, %26 : vector<8x64xf32>
    %28 = vector.broadcast %2 : vector<1x64xf32> to vector<8x64xf32>
    %29 = arith.addf %27, %28 : vector<8x64xf32>
    %cst_12 = arith.constant 0.000000e+00 : f32
    %30 = vector.broadcast %cst_12 : f32 to vector<8x64xf32>
    %31 = arith.maximumf %29, %30 : vector<8x64xf32>
    %c0_13 = arith.constant 0 : index
    %c0_14 = arith.constant 0 : index
    %32 = vector.load %arg4[%c0_13, %c0_14] : memref<64x8xf32, #tpu.memory_space<vmem>>, vector<64x8xf32>
    %cst_15 = arith.constant dense<0.000000e+00> : vector<8x8xf32>
    %33 = tpu.matmul %31, %32, %cst_15 {dimension_numbers = #tpu.dot_dimension_numbers<[1], [0], [0], [1], [0, 0, 1, 1], [], []>} : vector<8x64xf32>, vector<64x8xf32>, vector<8x8xf32> -> vector<8x8xf32>
    %c0_16 = arith.constant 0 : index
    %c0_17 = arith.constant 0 : index
    %34 = vector.load %arg5[%c0_16, %c0_17] : memref<1x8xf32, #tpu.memory_space<vmem>>, vector<1x8xf32>
    %35 = vector.broadcast %34 : vector<1x8xf32> to vector<8x8xf32>
    %36 = arith.addf %33, %35 : vector<8x8xf32>
    %c0_18 = arith.constant 0 : index
    %c0_19 = arith.constant 0 : index
    %37 = vector.load %arg6[%c0_18, %c0_19] : memref<8x8xf32, #tpu.memory_space<vmem>>, vector<8x8xf32>
    tpu.vector_store %arg6[%c0_18, %c0_19], %36 {strides = array<i32>} : memref<8x8xf32, #tpu.memory_space<vmem>>, vector<8x8xf32>,
    return
  }
  func.func @transform_0(%arg0: i32) -> (i32, i32) {
    %c0_i32 = arith.constant 0 : i32
    %c0_i32_0 = arith.constant 0 : i32
    return %arg0, %c0_i32 : i32, i32
  }
  func.func @transform_1(%arg0: i32) -> (i32, i32) {
    %c0_i32 = arith.constant 0 : i32
    %c0_i32_0 = arith.constant 0 : i32
    %c0_i32_1 = arith.constant 0 : i32
    return %c0_i32, %c0_i32_0 : i32, i32
  }
  func.func @transform_2(%arg0: i32) -> (i32, i32) {
    %c0_i32 = arith.constant 0 : i32
    %c0_i32_0 = arith.constant 0 : i32
    %c0_i32_1 = arith.constant 0 : i32
    return %c0_i32, %c0_i32_0 : i32, i32
  }
  func.func @transform_3(%arg0: i32) -> (i32, i32) {
    %c0_i32 = arith.constant 0 : i32
    %c0_i32_0 = arith.constant 0 : i32
    %c0_i32_1 = arith.constant 0 : i32
    return %c0_i32, %c0_i32_0 : i32, i32
  }
  func.func @transform_4(%arg0: i32) -> (i32, i32) {
    %c0_i32 = arith.constant 0 : i32
    %c0_i32_0 = arith.constant 0 : i32
    %c0_i32_1 = arith.constant 0 : i32
    return %c0_i32, %c0_i32_0 : i32, i32
  }
  func.func @transform_5(%arg0: i32) -> (i32, i32) {
    %c0_i32 = arith.constant 0 : i32
    %c0_i32_0 = arith.constant 0 : i32
    return %arg0, %c0_i32 : i32, i32
  }
}

</mosaic_0001>

<llo_original>
// kernel: qnetwork_forward.1
$region0: #{qnetwork_forward.1}
  #allocation0 [shape = 'u32[]', space=smem, size = 0x4, offset = 0x4, fixed_abs, tag = 'smem constant byte address 0x4 - core index']
  #allocation1 [shape = 'u32[144,128]{1,0:T(1,128)}', space=vmem, size = 0x12000, scoped, tag = 'internal scratch']
  %s0 = inlined_call_operand.vmem [shape: f32[8,16], index: 0, kind: input, shape index: {}]
  %s1 = inlined_call_operand.vmem [shape: f32[16,64], index: 1, kind: input, shape index: {}]
  %s2 = inlined_call_operand.vmem [shape: f32[3,64], index: 2, kind: input, shape index: {}]
  %s3 = inlined_call_operand.vmem [shape: f32[64,8], index: 3, kind: input, shape index: {}]
  %s4 = inlined_call_operand.vmem [shape: f32[1,8], index: 4, kind: input, shape index: {}]
  %s5 = inlined_call_operand.hbm [shape: f32[8,8], index: 5, kind: output, shape index: {}]
  %s6 = sld [smem:[#allocation0]]
  $region30: #{qnetwork_forward.1} parent=0
    _
  %s8 = ssub.s32 1, %s6
  %s9 = scalar_select 0, %s8, %s6
  $region1: #{qnetwork_forward.1} parent=0
    #allocation2 [shape = 'u8[4096]{0}', space=vmem, size = 0x1000, scoped, tag = 'output window, operand 0, single buffered']
    #allocation3 [shape = 's32[1]{0}', space=sflag, size = 0x4, scoped, tag = 'scoped memory for qnetwork_forward.1']
    %10 = vsyncpa [#allocation3], 0
    // Predicated region
    $region2: #{qnetwork_forward.1} parent=1 // pred_check
      _
    $region3: #{qnetwork_forward.1} parent=1 // pred_check_branch
      %12 = sbr.rel (0) target = $region5
    $region4: #{qnetwork_forward.1} parent=1 // pred_region
      _
    $region5: #{qnetwork_forward.1} parent=1 // pred_fallthru
      _
    // Predicated region
    $region6: #{qnetwork_forward.1} parent=1 // pred_check
      _
    $region7: #{qnetwork_forward.1} parent=1 // pred_check_branch
      %14 = sbr.rel (0) target = $region9
    $region8: #{qnetwork_forward.1} parent=1 // pred_region
      _
    $region9: #{qnetwork_forward.1} parent=1 // pred_fallthru
      _
    // Predicated region
    $region10: #{qnetwork_forward.1} parent=1 // pred_check
      _
    $region11: #{qnetwork_forward.1} parent=1 // pred_check_branch
      %16 = sbr.rel (0) target = $region13
    $region12: #{qnetwork_forward.1} parent=1 // pred_region
      _
    $region13: #{qnetwork_forward.1} parent=1 // pred_fallthru
      _
    // Predicated region
    $region14: #{qnetwork_forward.1} parent=1 // pred_check
      _
    $region15: #{qnetwork_forward.1} parent=1 // pred_check_branch
      %18 = sbr.rel (0) target = $region17
    $region16: #{qnetwork_forward.1} parent=1 // pred_region
      _
    $region17: #{qnetwork_forward.1} parent=1 // pred_fallthru
      _
    // Predicated region
    $region18: #{qnetwork_forward.1} parent=1 // pred_check
      _
    $region19: #{qnetwork_forward.1} parent=1 // pred_check_branch
      %20 = sbr.rel (0) target = $region21
    $region20: #{qnetwork_forward.1} parent=1 // pred_region
      _
    $region21: #{qnetwork_forward.1} parent=1 // pred_fallthru
      _
    %v21 = vld [vmem:[%s2] sm:$0x1]
    %v22 = vld [vmem:[%s2 + $0x1] sm:$0x1]
    %v23 = vld [vmem:[%s2 + $0x2] sm:$0x1]
    %v24 = vld [vmem:[%s0] sm:$0xff]
    %v25 = vld [vmem:[%s1] sm:$0xff]
    %v26 = vld [vmem:[%s1 + $0x8] sm:$0xff]
    %v27 = vlaneseq
    %v28 = vshrl.u32 %v27, 7
    %v29 = vsub.s32 0, %v28
    %v30 = vrot.slane %v21, %v29
    %vm31 = vcmask 130048
    %v33 = vsel %vm31, %v24, 0
    %35 = vmatprep.subr.mxu0 0.0
    %36 = vmatpush1.msra.mxu0 0.0
    %37 = vmatprep.subr.mxu0 0.0
    %38 = vmatpush1.msra.mxu0 0.0
    %39 = vmatprep.subr.mxu0 0.0
    %40 = vmatpush1.msra.mxu0 0.0
    %41 = vmatprep.subr.mxu0 0.0
    %42 = vmatpush1.msra.mxu0 0.0
    %43 = vmatprep.subr.mxu0 0.0
    %44 = vmatpush1.msra.mxu0 0.0
    %45 = vmatprep.subr.mxu0 0.0
    %46 = vmatpush1.msra.mxu0 0.0
    %47 = vmatprep.subr.mxu0 0.0
    %48 = vmatpush1.msra.mxu0 0.0
    %49 = vmatprep.subr.mxu0 0.0
    %50 = vmatpush1.msra.mxu0 0.0
    %51 = vmatprep.subr.mxu0 0.0
    %52 = vmatpush1.msra.mxu0 0.0
    %53 = vmatprep.subr.mxu0 0.0
    %54 = vmatpush1.msra.mxu0 0.0
    %55 = vmatprep.subr.mxu0 0.0
    %56 = vmatpush1.msra.mxu0 0.0
    %57 = vmatprep.subr.mxu0 0.0
    %58 = vmatpush1.msra.mxu0 0.0
    %59 = vmatprep.subr.mxu0 0.0
    %60 = vmatpush1.msra.mxu0 0.0
    %61 = vmatprep.subr.mxu0 0.0
    %62 = vmatpush1.msra.mxu0 0.0
    %63 = vmatprep.subr.mxu0 0.0
    %64 = vmatpush1.msra.mxu0 %v26
    %65 = vmatprep.subr.mxu0 0.0
    %66 = vmatpush1.msra.mxu0 %v25
    %67 = vmatprep.subr.mxu0 0.0
    %68 = vmatpush2.msra.mxu0 0.0
    %69 = vmatprep.subr.mxu0 0.0
    %70 = vmatpush2.msra.mxu0 0.0
    %71 = vmatprep.subr.mxu0 0.0
    %72 = vmatpush2.msra.mxu0 0.0
    %73 = vmatprep.subr.mxu0 0.0
    %74 = vmatpush2.msra.mxu0 0.0
    %75 = vmatprep.subr.mxu0 0.0
    %76 = vmatpush2.msra.mxu0 0.0
    %77 = vmatprep.subr.mxu0 0.0
    %78 = vmatpush2.msra.mxu0 0.0
    %79 = vmatprep.subr.mxu0 0.0
    %80 = vmatpush2.msra.mxu0 0.0
    %81 = vmatprep.subr.mxu0 0.0
    %82 = vmatpush2.msra.mxu0 0.0
    %83 = vmatprep.subr.mxu0 0.0
    %84 = vmatpush2.msra.mxu0 0.0
    %85 = vmatprep.subr.mxu0 0.0
    %86 = vmatpush2.msra.mxu0 0.0
    %87 = vmatprep.subr.mxu0 0.0
    %88 = vmatpush2.msra.mxu0 0.0
    %89 = vmatprep.subr.mxu0 0.0
    %90 = vmatpush2.msra.mxu0 0.0
    %91 = vmatprep.subr.mxu0 0.0
    %92 = vmatpush2.msra.mxu0 0.0
    %93 = vmatprep.subr.mxu0 0.0
    %94 = vmatpush2.msra.mxu0 0.0
    %95 = vmatprep.subr.mxu0 0.0
    %96 = vmatpush2.msra.mxu0 0.0
    %97 = vmatprep.subr.mxu0 0.0
    %98 = vmatpush2.msra.mxu0 0.0
    %99 = vmatprep.mubr.f32.mxu0 0.0
    %100 = vmatmul.mubr.f32.gmra.mxu0 %v33
    %v101 = vpop.f32.mrf.mxu0
    %v102 = vadd.f32 %v30, %v101
    %v103 = vpop.f32.mrf.mxu0
    %104 = vdwg.mxu0
    %vm105 = vcmask 523264
    %v106 = vsel %vm105, %v102, 0.0
    %107 = vadd.xlane.f32.xlu0 %v106
    %v108 = vpop.xlane.xlu0 %107
    %v109 = vrcp.pop 64.0
    %v110 = vmul.f32 %v108, %v109
    %v111 = vmul.f32 %v102, %v102
    %v112 = vsel %vm105, %v111, 0.0
    %113 = vadd.xlane.f32.xlu0 %v112
    %v114 = vpop.xlane.xlu0 %113
    %v115 = vmul.f32 %v114, %v109
    %v116 = vmul.f32 %v110, %v110
    %v117 = vsub.f32 %v115, %v116
    %v118 = vsub.f32 %v102, %v110
    %v119 = vadd.f32 %v117, 1e-05
    %v120 = vrsqrt.pop %v119
    %v121 = vmul.f32 %v118, %v120
    %v122 = vlaneseq
    %v123 = vshrl.u32 %v122, 7
    %v124 = vsub.s32 0, %v123
    %v125 = vrot.slane %v22, %v124
    %v126 = vmul.f32 %v121, %v125
    %v127 = vlaneseq
    %v128 = vshrl.u32 %v127, 7
    %v129 = vsub.s32 0, %v128
    %v130 = vrot.slane %v23, %v129
    %v131 = vadd.f32 %v126, %v130
    %v132 = vmax.f32 %v131, 0.0
    %v133 = vld [vmem:[%s3] sm:$0xff]
    %v134 = vld [vmem:[%s3 + $0x8] sm:$0xff]
    %v135 = vld [vmem:[%s3 + $0x10] sm:$0xff]
    %v136 = vld [vmem:[%s3 + $0x18] sm:$0xff]
    %v137 = vld [vmem:[%s3 + $0x20] sm:$0xff]
    %v138 = vld [vmem:[%s3 + $0x28] sm:$0xff]
    %v139 = vld [vmem:[%s3 + $0x30] sm:$0xff]
    %v140 = vld [vmem:[%s3 + $0x38] sm:$0xff]
    %v141 = vld [vmem:[%s4] sm:$0x1]
    %v143 = vlaneseq
    %v144 = vshrl.u32 %v143, 7
    %v145 = vsub.s32 0, %v144
    %v146 = vrot.slane %v141, %v145
    %v149 = vsel %vm105, %v132, 0
    %151 = vmatprep.subr.mxu0 0.0
    %152 = vmatpush1.msra.mxu0 0.0
    %153 = vmatprep.subr.mxu0 0.0
    %154 = vmatpush1.msra.mxu0 0.0
    %155 = vmatprep.subr.mxu0 0.0
    %156 = vmatpush1.msra.mxu0 0.0
    %157 = vmatprep.subr.mxu0 0.0
    %158 = vmatpush1.msra.mxu0 0.0
    %159 = vmatprep.subr.mxu0 0.0
    %160 = vmatpush1.msra.mxu0 0.0
    %161 = vmatprep.subr.mxu0 0.0
    %162 = vmatpush1.msra.mxu0 0.0
    %163 = vmatprep.subr.mxu0 0.0
    %164 = vmatpush1.msra.mxu0 0.0
    %165 = vmatprep.subr.mxu0 0.0
    %166 = vmatpush1.msra.mxu0 0.0
    %167 = vmatprep.subr.mxu0 0.0
    %168 = vmatpush1.msra.mxu0 %v140
    %169 = vmatprep.subr.mxu0 0.0
    %170 = vmatpush1.msra.mxu0 %v139
    %171 = vmatprep.subr.mxu0 0.0
    %172 = vmatpush1.msra.mxu0 %v138
    %173 = vmatprep.subr.mxu0 0.0
    %174 = vmatpush1.msra.mxu0 %v137
    %175 = vmatprep.subr.mxu0 0.0
    %176 = vmatpush1.msra.mxu0 %v136
    %177 = vmatprep.subr.mxu0 0.0
    %178 = vmatpush1.msra.mxu0 %v135
    %179 = vmatprep.subr.mxu0 0.0
    %180 = vmatpush1.msra.mxu0 %v134
    %181 = vmatprep.subr.mxu0 0.0
    %182 = vmatpush1.msra.mxu0 %v133
    %183 = vmatprep.subr.mxu0 0.0
    %184 = vmatpush2.msra.mxu0 0.0
    %185 = vmatprep.subr.mxu0 0.0
    %186 = vmatpush2.msra.mxu0 0.0
    %187 = vmatprep.subr.mxu0 0.0
    %188 = vmatpush2.msra.mxu0 0.0
    %189 = vmatprep.subr.mxu0 0.0
    %190 = vmatpush2.msra.mxu0 0.0
    %191 = vmatprep.subr.mxu0 0.0
    %192 = vmatpush2.msra.mxu0 0.0
    %193 = vmatprep.subr.mxu0 0.0
    %194 = vmatpush2.msra.mxu0 0.0
    %195 = vmatprep.subr.mxu0 0.0
    %196 = vmatpush2.msra.mxu0 0.0
    %197 = vmatprep.subr.mxu0 0.0
    %198 = vmatpush2.msra.mxu0 0.0
    %199 = vmatprep.subr.mxu0 0.0
    %200 = vmatpush2.msra.mxu0 0.0
    %201 = vmatprep.subr.mxu0 0.0
    %202 = vmatpush2.msra.mxu0 0.0
    %203 = vmatprep.subr.mxu0 0.0
    %204 = vmatpush2.msra.mxu0 0.0
    %205 = vmatprep.subr.mxu0 0.0
    %206 = vmatpush2.msra.mxu0 0.0
    %207 = vmatprep.subr.mxu0 0.0
    %208 = vmatpush2.msra.mxu0 0.0
    %209 = vmatprep.subr.mxu0 0.0
    %210 = vmatpush2.msra.mxu0 0.0
    %211 = vmatprep.subr.mxu0 0.0
    %212 = vmatpush2.msra.mxu0 0.0
    %213 = vmatprep.subr.mxu0 0.0
    %214 = vmatpush2.msra.mxu0 0.0
    %215 = vmatprep.mubr.f32.mxu0 0.0
    %216 = vmatmul.mubr.f32.gmra.mxu0 %v149
    %v217 = vpop.f32.mrf.mxu0
    %v218 = vadd.f32 %v146, %v217
    %v219 = vpop.f32.mrf.mxu0
    %220 = vdwg.mxu0
    %vm221 = vcmask 64512
    %222 = vst.msk [vmem:[#allocation2] sm:$0xff] %vm221, %v218
    // Predicated region
    $region22: #{qnetwork_forward.1} parent=1 // pred_check
      _
    $region23: #{qnetwork_forward.1} parent=1 // pred_check_branch
      %224 = sbr.rel (0) target = $region25
    $region24: #{qnetwork_forward.1} parent=1 // pred_region
      %s226 = ssub.s32 128, 128
      %227 = vsyncadd [#allocation3], %s226
      %s229 = sshll.u32 [#allocation2], 4
      %s230 = int_to_ptr.vmem [resolvable:$true] %s229
      %232 = dma.vmem_to_hbm [thread:$0]  %s230, 128, %s5, [#allocation3]
    $region25: #{qnetwork_forward.1} parent=1 // pred_fallthru
      _
    // Predicated region
    $region26: #{qnetwork_forward.1} parent=1 // pred_check
      _
    $region27: #{qnetwork_forward.1} parent=1 // pred_check_branch
      %234 = sbr.rel (0) target = $region29
    $region28: #{qnetwork_forward.1} parent=1 // pred_region
      %235 = dma.done [#allocation3], 128
    $region29: #{qnetwork_forward.1} parent=1 // pred_fallthru
      _
    %236 = vsyncpa [#allocation3], 1

</llo_original>
